<compile_context>
chip_gen: v7x
topology: tpu7x:2x2x1
jax: 0.10.0
libtpu: 0.0.40
codegen_flags: <defaults>
</compile_context>

<pallas_src>
import jax
import jax.numpy as jnp
from jax import lax
from jax.experimental import pallas as pl
from jax.experimental.pallas import tpu as pltpu

HIDDEN = 256
LN_EPS = 1e-5            # torch.nn.LayerNorm default
DEFAULT_BLOCK_B = 512    # preferred batch tile (multiple of 128) for large B


def domain_classifier_kernel(x_ref, w1_ref, p_ref, b2_ref, o_ref):
    # p_ref rows: 0=b1, 1=gamma, 2=beta, 3=w2  (each (1, 256) f32)

    # ---- Linear 1 (MXU): in-kernel bf16 cast of x, f32 accumulation ----
    x_bf = x_ref[...].astype(jnp.bfloat16)                       # hides under DMA
    h = jnp.dot(x_bf, w1_ref[...],
                preferred_element_type=jnp.float32) + p_ref[0:1, :]   # (TB, 256)

    # ---- LayerNorm over last dim (256), affine, all f32 ----
    mean = jnp.mean(h, axis=-1, keepdims=True)
    centered = h - mean
    var = jnp.mean(centered * centered, axis=-1, keepdims=True)
    h_norm = centered * lax.rsqrt(var + LN_EPS)
    h_norm = h_norm * p_ref[1:2, :] + p_ref[2:3, :]

    # ---- ReLU ----
    h_act = jnp.maximum(h_norm, 0.0)

    # ---- Linear 2: VPU multiply + row reduce (no transpose, no M=1 MXU op) ----
    logits = jnp.sum(h_act * p_ref[3:4, :], axis=-1, keepdims=True)   # (TB, 1)
    o_ref[...] = (logits + b2_ref[0]).astype(o_ref.dtype)


def _round_up(x, m):
    return ((x + m - 1) // m) * m


def _vmem_estimate(tb, f):
    return (2 * tb * f * 4            # x tile, f32, double-buffered
            + tb * f * 2              # in-kernel bf16 copy of x tile
            + 2 * f * HIDDEN * 2      # w1 bf16 (double-buffered by default)
            + 8 * tb * HIDDEN * 4     # f32 intermediates (h / norm / act / ...)
            + 2 * 4 * HIDDEN * 4      # packed LN/bias params
            + 4 * tb * 4              # output buffers
            + (2 << 20))              # compiler headroom


def domain_classifier(x, w1, b1, gamma, beta, w2, b2, *,
                      block_b=DEFAULT_BLOCK_B):
    B, F = x.shape

    # Generation-aware VMEM cap (~75% of physical: ~96 MiB v5e/v6e, ~48 MiB v7x).
    try:
        phys = pltpu.get_tpu_info().vmem_capacity_bytes
        vmem_cap = max(16 << 20, (int(phys) * 3) // 4)
    except Exception:
        vmem_cap = 48 << 20   # safe on every generation

    # Batch tile: full array for tiny B; otherwise a 128-multiple tile chosen
    # so there are at least 2 blocks (v7x megacore) and the pipeline fits VMEM.
    if B <= 128:
        tb = B
    else:
        tb = max(128, min(block_b, _round_up(pl.cdiv(B, 2), 128)))
        while tb > 128 and _vmem_estimate(tb, F) > vmem_cap:
            tb = _round_up(tb // 2, 128)
    nb = pl.cdiv(B, tb)

    vmem_limit = int(min(vmem_cap, max(16 << 20, _vmem_estimate(tb, F))))

    # Pack the small per-channel params into one resident (4, 256) f32 array.
    p_pack = jnp.stack([
        b1.astype(jnp.float32).reshape(HIDDEN),
        gamma.astype(jnp.float32).reshape(HIDDEN),
        beta.astype(jnp.float32).reshape(HIDDEN),
        w2.astype(jnp.float32).reshape(HIDDEN),
    ], axis=0)                                            # (4, 256)
    w1_bf = w1.astype(jnp.bfloat16)                       # resident bf16 weights
    b2_s = b2.reshape(1).astype(jnp.float32)              # SMEM scalar

    cost = pl.CostEstimate(
        flops=2 * B * F * HIDDEN + 12 * B * HIDDEN,
        transcendentals=B,                                # rsqrt per row
        bytes_accessed=4 * B * F + 2 * F * HIDDEN + 16 * HIDDEN + 4 * B + 4)

    out = pl.pallas_call(
        domain_classifier_kernel,
        out_shape=jax.ShapeDtypeStruct((B, 1), jnp.float32),
        grid=(nb,),
        in_specs=[
            pl.BlockSpec((tb, F), lambda i: (i, 0)),            # x: batch-tiled
            pl.BlockSpec((F, HIDDEN), lambda i: (0, 0)),        # w1 (VMEM-resident)
            pl.BlockSpec((4, HIDDEN), lambda i: (0, 0)),        # packed b1/g/beta/w2
            pl.BlockSpec(memory_space=pltpu.MemorySpace.SMEM),  # b2 scalar
        ],
        out_specs=pl.BlockSpec((tb, 1), lambda i: (i, 0)),
        compiler_params=pltpu.CompilerParams(
            dimension_semantics=("parallel",),
            vmem_limit_bytes=vmem_limit),
        cost_estimate=cost,
    )(x, w1_bf, p_pack, b2_s)

    return out


def init_params(key, in_features):
    """PyTorch-style nn.Linear init; LayerNorm gamma=1, beta=0."""
    k1, k2, k3, k4 = jax.random.split(key, 4)
    bound1 = 1.0 / jnp.sqrt(jnp.float32(in_features))
    w1 = jax.random.uniform(k1, (in_features, HIDDEN), jnp.float32,
                            -bound1, bound1)
    b1 = jax.random.uniform(k2, (HIDDEN,), jnp.float32, -bound1, bound1)
    gamma = jnp.ones((HIDDEN,), jnp.float32)
    beta = jnp.zeros((HIDDEN,), jnp.float32)
    bound2 = 1.0 / jnp.sqrt(jnp.float32(HIDDEN))
    w2 = jax.random.uniform(k3, (HIDDEN, 1), jnp.float32, -bound2, bound2)
    b2 = jax.random.uniform(k4, (1,), jnp.float32, -bound2, bound2)
    return w1, b1, gamma, beta, w2, b2


def reference(x, w1, b1, gamma, beta, w2, b2):
    # Mirrors the kernel math: bf16 GEMM-1 operands with f32 accumulation,
    # f32 LayerNorm / ReLU / final linear.
    h = jnp.dot(x.astype(jnp.bfloat16), w1.astype(jnp.bfloat16),
                preferred_element_type=jnp.float32) + b1
    mean = jnp.mean(h, axis=-1, keepdims=True)
    var = jnp.mean((h - mean) ** 2, axis=-1, keepdims=True)
    h = (h - mean) / jnp.sqrt(var + LN_EPS) * gamma + beta
    h = jnp.maximum(h, 0.0)
    return h @ w2.reshape(HIDDEN, 1) + b2


if __name__ == "__main__":
    key = jax.random.PRNGKey(0)
    k_x, k_p, k_x2 = jax.random.split(key, 3)

    # Small case (single block, full-array tiles).
    batch, in_features = 8, 32
    x = jax.random.normal(k_x, (batch, in_features), jnp.float32)
    params = init_params(k_p, in_features)

    out = jax.block_until_ready(domain_classifier(x, *params))
    ref = reference(x, *params)
    assert out.shape == (batch, 1)
    assert jnp.allclose(out, ref, atol=1e-3, rtol=1e-3)

    # Larger case: multi-block grid with a ragged (non-multiple) last tile.
    batch2, in_features2 = 600, 384
    x2 = jax.random.normal(k_x2, (batch2, in_features2), jnp.float32)
    params2 = init_params(k_p, in_features2)

    out2 = jax.block_until_ready(
        domain_classifier(x2, *params2, block_b=256))
    ref2 = reference(x2, *params2)
    assert out2.shape == (batch2, 1)
    assert jnp.allclose(out2, ref2, atol=1e-3, rtol=1e-3)

    print("KERNEL_OK")
</pallas_src>

<mosaic_0001>
module attributes {stable_mosaic.version = 11 : i64} {
  func.func @domain_classifier_kernel(%arg0: i32, %arg1: memref<8x32xf32, #tpu.memory_space<vmem>>, %arg2: memref<32x256xbf16, #tpu.memory_space<vmem>>, %arg3: memref<4x256xf32, #tpu.memory_space<vmem>>, %arg4: memref<1xf32, #tpu.memory_space<smem>>, %arg5: memref<8x1xf32, #tpu.memory_space<vmem>>) attributes {dimension_semantics = [#tpu.dimension_semantics<parallel>], iteration_bounds = array<i64: 1>, scalar_prefetch = 0 : i64, scratch_operands = 0 : i64, tpu.core_type = #tpu.core_type<tc>, window_params = [{transform_indices = @transform_0, window_bounds = array<i64: 8, 32>}, {pipeline_mode = #tpu.pipeline_mode<synchronous>, transform_indices = @transform_1, window_bounds = array<i64: 32, 256>}, {pipeline_mode = #tpu.pipeline_mode<synchronous>, transform_indices = @transform_2, window_bounds = array<i64: 4, 256>}, {transform_indices = @transform_3, window_bounds = array<i64: 1>}, {transform_indices = @transform_4, window_bounds = array<i64: 8, 1>}]} {
    %c0 = arith.constant 0 : index
    %c0_0 = arith.constant 0 : index
    %0 = vector.load %arg1[%c0, %c0_0] : memref<8x32xf32, #tpu.memory_space<vmem>>, vector<8x32xf32>
    %1 = arith.truncf %0 : vector<8x32xf32> to vector<8x32xbf16>
    %c0_1 = arith.constant 0 : index
    %c0_2 = arith.constant 0 : index
    %2 = vector.load %arg2[%c0_1, %c0_2] : memref<32x256xbf16, #tpu.memory_space<vmem>>, vector<32x256xbf16>
    %cst = arith.constant dense<0.000000e+00> : vector<8x256xf32>
    %3 = tpu.matmul %1, %2, %cst {dimension_numbers = #tpu.dot_dimension_numbers<[1], [0], [0], [1], [0, 0, 1, 1], [], []>} : vector<8x32xbf16>, vector<32x256xbf16>, vector<8x256xf32> -> vector<8x256xf32>
    %c0_3 = arith.constant 0 : index
    %c0_4 = arith.constant 0 : index
    %4 = vector.load %arg3[%c0_3, %c0_4] : memref<4x256xf32, #tpu.memory_space<vmem>>, vector<1x256xf32>
    %5 = vector.broadcast %4 : vector<1x256xf32> to vector<8x256xf32>
    %6 = arith.addf %3, %5 : vector<8x256xf32>
    %cst_5 = arith.constant dense<0.000000e+00> : vector<8xf32>
    %7 = vector.multi_reduction <add>, %6, %cst_5 [1] : vector<8x256xf32> to vector<8xf32>
    %8 = vector.shape_cast %7 : vector<8xf32> to vector<8x1xf32>
    %cst_6 = arith.constant 2.560000e+02 : f32
    %9 = vector.broadcast %cst_6 : f32 to vector<8x1xf32>
    %10 = arith.divf %8, %9 : vector<8x1xf32>
    %11 = vector.broadcast %10 : vector<8x1xf32> to vector<8x256xf32>
    %12 = arith.subf %6, %11 : vector<8x256xf32>
    %13 = arith.mulf %12, %12 : vector<8x256xf32>
    %cst_7 = arith.constant dense<0.000000e+00> : vector<8xf32>
    %14 = vector.multi_reduction <add>, %13, %cst_7 [1] : vector<8x256xf32> to vector<8xf32>
    %15 = vector.shape_cast %14 : vector<8xf32> to vector<8x1xf32>
    %cst_8 = arith.constant 2.560000e+02 : f32
    %16 = vector.broadcast %cst_8 : f32 to vector<8x1xf32>
    %17 = arith.divf %15, %16 : vector<8x1xf32>
    %cst_9 = arith.constant 9.99999974E-6 : f32
    %18 = vector.broadcast %cst_9 : f32 to vector<8x1xf32>
    %19 = arith.addf %17, %18 : vector<8x1xf32>
    %20 = math.rsqrt %19 : vector<8x1xf32>
    %21 = vector.broadcast %20 : vector<8x1xf32> to vector<8x256xf32>
    %22 = arith.mulf %12, %21 : vector<8x256xf32>
    %c1 = arith.constant 1 : index
    %c0_10 = arith.constant 0 : index
    %23 = vector.load %arg3[%c1, %c0_10] : memref<4x256xf32, #tpu.memory_space<vmem>>, vector<1x256xf32>
    %24 = vector.broadcast %23 : vector<1x256xf32> to vector<8x256xf32>
    %25 = arith.mulf %22, %24 : vector<8x256xf32>
    %c2 = arith.constant 2 : index
    %c0_11 = arith.constant 0 : index
    %26 = vector.load %arg3[%c2, %c0_11] : memref<4x256xf32, #tpu.memory_space<vmem>>, vector<1x256xf32>
    %27 = vector.broadcast %26 : vector<1x256xf32> to vector<8x256xf32>
    %28 = arith.addf %25, %27 : vector<8x256xf32>
    %cst_12 = arith.constant 0.000000e+00 : f32
    %29 = vector.broadcast %cst_12 : f32 to vector<8x256xf32>
    %30 = arith.maximumf %28, %29 : vector<8x256xf32>
    %c3 = arith.constant 3 : index
    %c0_13 = arith.constant 0 : index
    %31 = vector.load %arg3[%c3, %c0_13] : memref<4x256xf32, #tpu.memory_space<vmem>>, vector<1x256xf32>
    %32 = vector.broadcast %31 : vector<1x256xf32> to vector<8x256xf32>
    %33 = arith.mulf %30, %32 : vector<8x256xf32>
    %cst_14 = arith.constant dense<0.000000e+00> : vector<8xf32>
    %34 = vector.multi_reduction <add>, %33, %cst_14 [1] : vector<8x256xf32> to vector<8xf32>
    %35 = vector.shape_cast %34 : vector<8xf32> to vector<8x1xf32>
    %c0_15 = arith.constant 0 : index
    %36 = memref.load %arg4[%c0_15] : memref<1xf32, #tpu.memory_space<smem>>
    %37 = vector.broadcast %36 : f32 to vector<8x1xf32>
    %38 = arith.addf %35, %37 : vector<8x1xf32>
    %c0_16 = arith.constant 0 : index
    %c0_17 = arith.constant 0 : index
    %39 = vector.load %arg5[%c0_16, %c0_17] : memref<8x1xf32, #tpu.memory_space<vmem>>, vector<8x1xf32>
    tpu.vector_store %arg5[%c0_16, %c0_17], %38 {strides = array<i32>} : memref<8x1xf32, #tpu.memory_space<vmem>>, vector<8x1xf32>,
    return
  }
  func.func @transform_0(%arg0: i32) -> (i32, i32) {
    %c0_i32 = arith.constant 0 : i32
    %c0_i32_0 = arith.constant 0 : i32
    return %arg0, %c0_i32 : i32, i32
  }
  func.func @transform_1(%arg0: i32) -> (i32, i32) {
    %c0_i32 = arith.constant 0 : i32
    %c0_i32_0 = arith.constant 0 : i32
    %c0_i32_1 = arith.constant 0 : i32
    return %c0_i32, %c0_i32_0 : i32, i32
  }
  func.func @transform_2(%arg0: i32) -> (i32, i32) {
    %c0_i32 = arith.constant 0 : i32
    %c0_i32_0 = arith.constant 0 : i32
    %c0_i32_1 = arith.constant 0 : i32
    return %c0_i32, %c0_i32_0 : i32, i32
  }
  func.func @transform_3(%arg0: i32) -> i32 {
    %c0_i32 = arith.constant 0 : i32
    %c0_i32_0 = arith.constant 0 : i32
    return %c0_i32 : i32
  }
  func.func @transform_4(%arg0: i32) -> (i32, i32) {
    %c0_i32 = arith.constant 0 : i32
    %c0_i32_0 = arith.constant 0 : i32
    return %arg0, %c0_i32 : i32, i32
  }
}

</mosaic_0001>

<llo_original>
// kernel: tpu_custom_call.1
$region0: #{tpu_custom_call.1}
  #allocation0 [shape = 'u32[]', space=smem, size = 0x4, offset = 0x4, fixed_abs, tag = 'smem constant byte address 0x4 - core index']
  #allocation1 [shape = 'u32[144,128]{1,0:T(1,128)}', space=vmem, size = 0x12000, scoped, tag = 'internal scratch']
  #allocation2 [shape = 'f32[1]{0:T(128)S(6)}', space=smem, size = 0x200, scoped, tag = 'scoped memory for tpu_custom_call.1']
  %s0 = inlined_call_operand.hbm [shape: f32[8,32], index: 0, kind: input, shape index: {}]
  %s1 = inlined_call_operand.hbm [shape: bf16[32,256], index: 1, kind: input, shape index: {}]
  %s2 = inlined_call_operand.vmem [shape: f32[4,256], index: 2, kind: input, shape index: {}]
  %s3 = inlined_call_operand.<no memory space> [shape: f32[1], index: 3, kind: input, shape index: {}]
  %s4 = inlined_call_operand.vmem [shape: f32[8,1], index: 4, kind: output, shape index: {}]
  %s5 = sld [smem:[#allocation0]]
  $region34: #{tpu_custom_call.1} parent=0
    _
  %s7 = ssub.s32 1, %s5
  %s8 = scalar_select 0, %s7, %s5
  %9 = sst [smem:[#allocation2]] %s3
  $region1: #{tpu_custom_call.1} parent=0
    #allocation3 [shape = 'u8[4096]{0}', space=vmem, size = 0x1000, scoped, tag = 'input window, operand 0, single buffered']
    #allocation4 [shape = 's32[1]{0}', space=sflag, size = 0x4, scoped, tag = 'scoped memory for tpu_custom_call.1']
    #allocation5 [shape = 'u8[16384]{0}', space=vmem, size = 0x4000, scoped, tag = 'input window, operand 1, single buffered']
    #allocation6 [shape = 's32[1]{0}', space=sflag, size = 0x4, scoped, tag = 'scoped memory for tpu_custom_call.1']
    %10 = vsyncpa [#allocation4], 0
    %11 = vsyncpa [#allocation6], 0
    // Predicated region
    $region2: #{tpu_custom_call.1} parent=1 // pred_check
      _
    $region3: #{tpu_custom_call.1} parent=1 // pred_check_branch
      %13 = sbr.rel (0) target = $region5
    $region4: #{tpu_custom_call.1} parent=1 // pred_region
      %s15 = ssub.s32 128, 128
      %16 = vsyncadd [#allocation4], %s15
      %s18 = sshll.u32 [#allocation3], 4
      %s19 = int_to_ptr.vmem [resolvable:$true] %s18
      %21 = dma.hbm_to_vmem [thread:$0]  %s0, 128, %s19, [#allocation4]
    $region5: #{tpu_custom_call.1} parent=1 // pred_fallthru
      _
    // Predicated region
    $region6: #{tpu_custom_call.1} parent=1 // pred_check
      _
    $region7: #{tpu_custom_call.1} parent=1 // pred_check_branch
      %23 = sbr.rel (0) target = $region9
    $region8: #{tpu_custom_call.1} parent=1 // pred_region
      %s25 = ssub.s32 512, 512
      %26 = vsyncadd [#allocation6], %s25
      %s27 = sshll.u32 [#allocation5], 4
      %s28 = int_to_ptr.vmem [resolvable:$true] %s27
      %33 = dma.hbm_to_vmem [thread:$0]  %s1, 512, %s28, [#allocation6], 128, 128, 8
    $region9: #{tpu_custom_call.1} parent=1 // pred_fallthru
      _
    // Predicated region
    $region10: #{tpu_custom_call.1} parent=1 // pred_check
      _
    $region11: #{tpu_custom_call.1} parent=1 // pred_check_branch
      %35 = sbr.rel (0) target = $region13
    $region12: #{tpu_custom_call.1} parent=1 // pred_region
      _
    $region13: #{tpu_custom_call.1} parent=1 // pred_fallthru
      _
    // Predicated region
    $region14: #{tpu_custom_call.1} parent=1 // pred_check
      _
    $region15: #{tpu_custom_call.1} parent=1 // pred_check_branch
      %37 = sbr.rel (0) target = $region17
    $region16: #{tpu_custom_call.1} parent=1 // pred_region
      _
    $region17: #{tpu_custom_call.1} parent=1 // pred_fallthru
      _
    // Predicated region
    $region18: #{tpu_custom_call.1} parent=1 // pred_check
      _
    $region19: #{tpu_custom_call.1} parent=1 // pred_check_branch
      %39 = sbr.rel (0) target = $region21
    $region20: #{tpu_custom_call.1} parent=1 // pred_region
      %40 = dma.done [#allocation4], 128
    $region21: #{tpu_custom_call.1} parent=1 // pred_fallthru
      _
    // Predicated region
    $region22: #{tpu_custom_call.1} parent=1 // pred_check
      _
    $region23: #{tpu_custom_call.1} parent=1 // pred_check_branch
      %42 = sbr.rel (0) target = $region25
    $region24: #{tpu_custom_call.1} parent=1 // pred_region
      %43 = dma.done [#allocation6], 512
    $region25: #{tpu_custom_call.1} parent=1 // pred_fallthru
      _
    %v45 = vld [vmem:[#allocation3] sm:$0xff]
    %v46 = vpack.c.bf16 %v45, %v45
    %v47 = vld [vmem:[#allocation5] sm:$0xff]
    %v48 = vld [vmem:[#allocation5 + $0x8] sm:$0xff]
    %v49 = vld [vmem:[#allocation5 + $0x10] sm:$0xff]
    %v50 = vld [vmem:[#allocation5 + $0x18] sm:$0xff]
    %v51 = vld [vmem:[%s2] ss:$4 sm:$0x3]
    %v53 = vlaneseq
    %v54 = vshrl.u32 %v53, 7
    %v55 = vsub.s32 0, %v54
    %v56 = vrot.slane %v51, %v55
    %v57 = vlaneseq
    %v58 = vshrl.u32 %v57, 7
    %v59 = vsub.s32 1, %v58
    %v60 = vrot.slane %v51, %v59
    %v67 = vunpack.c.l.b16 %v47
    %v68 = vunpack.c.h.b16 %v47
    %v69 = vunpack.c.l.b16 %v48
    %v70 = vunpack.c.h.b16 %v48
    %v71 = vunpack.c.l.b16 %v49
    %v72 = vunpack.c.h.b16 %v49
    %v73 = vunpack.c.l.b16 %v50
    %v74 = vunpack.c.h.b16 %v50
    %v75 = vpack.c.b16 %v69, %v67
    %v76 = vpack.c.b16 %v70, %v68
    %v77 = vpack.c.b16 %v73, %v71
    %v78 = vpack.c.b16 %v74, %v72
    %vm83 = vcmask 261120
    %v85 = vsel %vm83, %v46, 0
    %87 = vmatprep.subr.bf16.mxu0 %v76
    %88 = vmatpush1.bf16.msra.mxu0 %v75
    %89 = vmatprep.subr.bf16.mxu0 %v78
    %90 = vmatpush1.bf16.msra.mxu0 %v77
    %91 = vmatprep.subr.bf16.mxu0 0
    %92 = vmatpush1.bf16.msra.mxu0 0
    %93 = vmatprep.subr.bf16.mxu0 0
    %94 = vmatpush1.bf16.msra.mxu0 0
    %95 = vmatprep.subr.bf16.mxu0 0
    %96 = vmatpush1.bf16.msra.mxu0 0
    %97 = vmatprep.subr.bf16.mxu0 0
    %98 = vmatpush1.bf16.msra.mxu0 0
    %99 = vmatprep.subr.bf16.mxu0 0
    %100 = vmatpush1.bf16.msra.mxu0 0
    %101 = vmatprep.subr.bf16.mxu0 0
    %102 = vmatpush1.bf16.msra.mxu0 0
    %103 = vmatprep.subr.bf16.mxu0 0
    %104 = vmatpush1.bf16.msra.mxu0 0
    %105 = vmatprep.subr.bf16.mxu0 0
    %106 = vmatpush1.bf16.msra.mxu0 0
    %107 = vmatprep.subr.bf16.mxu0 0
    %108 = vmatpush1.bf16.msra.mxu0 0
    %109 = vmatprep.subr.bf16.mxu0 0
    %110 = vmatpush1.bf16.msra.mxu0 0
    %111 = vmatprep.subr.bf16.mxu0 0
    %112 = vmatpush1.bf16.msra.mxu0 0
    %113 = vmatprep.subr.bf16.mxu0 0
    %114 = vmatpush1.bf16.msra.mxu0 0
    %115 = vmatprep.subr.bf16.mxu0 0
    %116 = vmatpush1.bf16.msra.mxu0 0
    %117 = vmatprep.subr.bf16.mxu0 0
    %118 = vmatpush1.bf16.msra.mxu0 0
    %119 = vmatprep.mubr.bf16.mxu0 0
    %120 = vmatmul.mubr.bf16.gmra.mrb[0].mxu0 %v85
    %v121 = vpop.f32.mrb[0].mxu0
    %v122 = vadd.f32 %v56, %v121
    %v123 = vpop.f32.mrb[0].mxu0
    %v124 = vadd.f32 %v60, %v123
    %v125 = vpop.f32.mrb[0].mxu0
    %v126 = vpop.f32.mrb[0].mxu0
    %127 = vdwg.mxu0
    %v128 = vadd.f32 %v122, %v124
    %129 = vadd.xlane.f32.xlu0 %v128
    %v130 = vpop.xlane.xlu0 %129
    %v131 = vrcp.pop 256.0
    %v132 = vmul.f32 %v130, %v131
    %v133 = vsub.f32 %v122, %v132
    %v134 = vsub.f32 %v124, %v132
    %v135 = vmul.f32 %v133, %v133
    %v136 = vmul.f32 %v134, %v134
    %v137 = vadd.f32 %v135, %v136
    %138 = vadd.xlane.f32.xlu0 %v137
    %v139 = vpop.xlane.xlu0 %138
    %v140 = vmul.f32 %v139, %v131
    %v141 = vadd.f32 %v140, 1e-05
    %v142 = vrsqrt.pop %v141
    %v143 = vmul.f32 %v133, %v142
    %v144 = vmul.f32 %v134, %v142
    %s145 = scalar_lea.vmem %s2, 1
    %v146 = vld [vmem:[%s145] ss:$4 sm:$0x3]
    %v148 = vlaneseq
    %v149 = vshrl.u32 %v148, 7
    %v150 = vsub.s32 0, %v149
    %v151 = vrot.slane %v146, %v150
    %v152 = vlaneseq
    %v153 = vshrl.u32 %v152, 7
    %v154 = vsub.s32 1, %v153
    %v155 = vrot.slane %v146, %v154
    %v158 = vmul.f32 %v143, %v151
    %v159 = vmul.f32 %v144, %v155
    %s160 = scalar_lea.vmem %s2, 2
    %v161 = vld [vmem:[%s160] ss:$4 sm:$0x3]
    %v163 = vlaneseq
    %v164 = vshrl.u32 %v163, 7
    %v165 = vsub.s32 0, %v164
    %v166 = vrot.slane %v161, %v165
    %v167 = vlaneseq
    %v168 = vshrl.u32 %v167, 7
    %v169 = vsub.s32 1, %v168
    %v170 = vrot.slane %v161, %v169
    %v173 = vadd.f32 %v158, %v166
    %v174 = vadd.f32 %v159, %v170
    %v175 = vmax.f32 %v173, 0.0
    %v176 = vmax.f32 %v174, 0.0
    %s177 = scalar_lea.vmem %s2, 3
    %v178 = vld [vmem:[%s177] ss:$4 sm:$0x3]
    %v180 = vlaneseq
    %v181 = vshrl.u32 %v180, 7
    %v182 = vsub.s32 0, %v181
    %v183 = vrot.slane %v178, %v182
    %v184 = vlaneseq
    %v185 = vshrl.u32 %v184, 7
    %v186 = vsub.s32 1, %v185
    %v187 = vrot.slane %v178, %v186
    %v190 = vmul.f32 %v175, %v183
    %v191 = vmul.f32 %v176, %v187
    %v192 = vadd.f32 %v190, %v191
    %193 = vadd.xlane.f32.xlu0 %v192
    %v194 = vpop.xlane.xlu0 %193
    %s195 = sld [smem:[#allocation2]]
    %v196 = vstv %s195
    %v197 = vadd.f32 %v194, %v196
    %vm198 = vcmask 7168
    %199 = vst.msk [vmem:[%s4] sm:$0xff] %vm198, %v197
    // Predicated region
    $region26: #{tpu_custom_call.1} parent=1 // pred_check
      _
    $region27: #{tpu_custom_call.1} parent=1 // pred_check_branch
      %201 = sbr.rel (0) target = $region29
    $region28: #{tpu_custom_call.1} parent=1 // pred_region
      _
    $region29: #{tpu_custom_call.1} parent=1 // pred_fallthru
      _
    // Predicated region
    $region30: #{tpu_custom_call.1} parent=1 // pred_check
      _
    $region31: #{tpu_custom_call.1} parent=1 // pred_check_branch
      %203 = sbr.rel (0) target = $region33
    $region32: #{tpu_custom_call.1} parent=1 // pred_region
      _
    $region33: #{tpu_custom_call.1} parent=1 // pred_fallthru
      _
    %204 = vsyncpa [#allocation4], 1
    %205 = vsyncpa [#allocation6], 1

</llo_original>
